<compile_context>
chip_gen: v7x
topology: tpu7x:2x2x1
jax: 0.10.0
libtpu: 0.0.40
codegen_flags: <defaults>
</compile_context>

<pallas_src>
import functools

import jax
import jax.numpy as jnp
from jax.experimental import pallas as pl
from jax.experimental.pallas import tpu as pltpu


def _sae_kernel(x_ref, bdec_ref, wencT_ref, benc_ref, wdec_ref,
                xrec_ref, stats_ref, *, k):
    x = x_ref[...]                       # [TB, D] f32
    b_dec = bdec_ref[...]                # [1, D]  f32
    b_enc = benc_ref[...]                # [1, H]  f32
    cdtype = wencT_ref.dtype             # MXU compute dtype (bf16)

    # encoder: (x - b_dec) @ W_enc.T + b_enc, then ReLU   (MXU bf16 -> f32 acc)
    sae_in = x - b_dec
    pre = jnp.dot(sae_in.astype(cdtype), wencT_ref[...],
                  preferred_element_type=jnp.float32) + b_enc     # [TB, H] f32
    pre = jnp.maximum(pre, 0.0)

    # top-k threshold per row via k iterative max extractions (k small & static).
    # Exact for distinct values; ties at/above the threshold keep extra entries
    # (measure-zero for continuous activations; reconstruction unaffected by the
    # extra zeros when fewer than k positives exist).
    # TODO(synk): for production H (tens of thousands of latents) these k
    #             full-width max/where passes saturate the VPU/XLU; a tiled
    #             running-threshold top-k would be needed there.
    work = pre
    thr = None
    for _ in range(k):
        thr = jnp.max(work, axis=-1, keepdims=True)
        work = jnp.where(work >= thr, -jnp.inf, work)
    z = jnp.where(pre >= thr, pre, 0.0)                           # sparse codes

    # decoder: z @ W_dec + b_dec   (MXU bf16 -> f32 acc)
    x_rec = jnp.dot(z.astype(cdtype), wdec_ref[...],
                    preferred_element_type=jnp.float32) + b_dec   # [TB, D]
    xrec_ref[...] = x_rec

    # Per-tile partial statistics for FVU, written as ONE full (8, D) tile:
    #   row 0: sum_b x     row 1: sum_b x^2     row 2: sum_b (x_rec - x)^2
    e = x_rec - x
    sx = jnp.sum(x, axis=0, keepdims=True)
    sx2 = jnp.sum(x * x, axis=0, keepdims=True)
    se2 = jnp.sum(e * e, axis=0, keepdims=True)
    rows = jax.lax.broadcasted_iota(jnp.int32, stats_ref.shape, 0)
    stats_ref[...] = jnp.where(rows == 0, sx,
                     jnp.where(rows == 1, sx2,
                     jnp.where(rows == 2, se2, 0.0)))


def _pick_tile_b(B):
    for tb in (256, 128, 64, 32, 16, 8):
        if B % tb == 0:
            return tb
    raise ValueError(f"batch size {B} must be a multiple of 8")


def sae_forward(x, w_enc, b_enc, w_dec, b_dec, *, k, tile_b=None,
                compute_dtype=jnp.bfloat16, vmem_limit_bytes=None):
    """Returns (x_reconstructed, fvu). x: [B, d_in] f32."""
    B, D = x.shape
    H = w_enc.shape[0]
    if tile_b is None:
        tile_b = _pick_tile_b(B)
    assert B % tile_b == 0 and tile_b % 8 == 0
    n_tiles = B // tile_b

    # nn.Linear applies weight.T; pre-transpose + bf16-cast once in the wrapper.
    # TODO(synk): for production SAE widths (H in the tens of thousands) the whole
    #             W_enc.T / W_dec blocks exceed v7x's 64 MiB VMEM even in bf16;
    #             tile H with a second grid axis there.
    wencT = w_enc.T.astype(compute_dtype)              # [D, H]
    wdecc = w_dec.astype(compute_dtype)                # [H, D]
    bdec2 = b_dec.reshape(1, D).astype(jnp.float32)
    benc2 = b_enc.reshape(1, H).astype(jnp.float32)

    kernel = functools.partial(_sae_kernel, k=k)

    def build(single_buffer_weights):
        const_kw = ({"pipeline_mode": pl.Buffered(buffer_count=1)}
                    if single_buffer_weights else {})
        in_specs = [
            pl.BlockSpec((tile_b, D), lambda i: (i, 0)),            # x tile
            pl.BlockSpec((1, D), lambda i: (0, 0), **const_kw),     # b_dec (resident)
            pl.BlockSpec((D, H), lambda i: (0, 0), **const_kw),     # W_enc.T (resident)
            pl.BlockSpec((1, H), lambda i: (0, 0), **const_kw),     # b_enc (resident)
            pl.BlockSpec((H, D), lambda i: (0, 0), **const_kw),     # W_dec (resident)
        ]
        out_specs = [
            pl.BlockSpec((tile_b, D), lambda i: (i, 0)),            # x_rec tile
            pl.BlockSpec((8, D), lambda i: (i, 0)),                 # per-tile stats
        ]
        return pl.pallas_call(
            kernel,
            out_shape=(jax.ShapeDtypeStruct((B, D), jnp.float32),
                       jax.ShapeDtypeStruct((n_tiles * 8, D), jnp.float32)),
            grid_spec=pltpu.PrefetchScalarGridSpec(
                num_scalar_prefetch=0,
                grid=(n_tiles,),
                in_specs=in_specs,
                out_specs=out_specs,
            ),
            compiler_params=pltpu.CompilerParams(
                dimension_semantics=("parallel",),    # no cross-step state
                vmem_limit_bytes=vmem_limit_bytes,
            ),
        )

    args = (x.astype(jnp.float32), bdec2, wencT, benc2, wdecc)
    try:
        x_rec, stats = build(True)(*args)
    except Exception:
        # pl.Buffered(1) unsupported on this jax version -> default double buffering.
        x_rec, stats = build(False)(*args)

    stats = stats.reshape(n_tiles, 8, D)
    sum_x = jnp.sum(stats[:, 0, :], axis=0)          # [D]
    sum_x2 = jnp.sum(stats[:, 1, :], axis=0)         # [D]
    err_sq = jnp.sum(stats[:, 2, :])                 # scalar
    # total_variance = sum_{b,f} (x - mean_f)^2 = sum_f (sum x^2 - (sum x)^2 / B)
    total_variance = jnp.sum(sum_x2 - (sum_x * sum_x) / B)
    fvu = err_sq / total_variance
    return x_rec, fvu


def sae_reference(x, w_enc, b_enc, w_dec, b_dec, *, k, compute_dtype=jnp.bfloat16):
    """Plain-JAX reference mirroring the PyTorch forward (same bf16 matmul quantization)."""
    sae_in = x - b_dec
    pre = jnp.dot(sae_in.astype(compute_dtype), w_enc.T.astype(compute_dtype),
                  preferred_element_type=jnp.float32) + b_enc
    pre = jnp.maximum(pre, 0.0)
    vals, idx = jax.lax.top_k(pre, k)
    z = jnp.zeros_like(pre)
    z = z.at[jnp.arange(x.shape[0])[:, None], idx].set(vals)
    x_rec = jnp.dot(z.astype(compute_dtype), w_dec.astype(compute_dtype),
                    preferred_element_type=jnp.float32) + b_dec
    e = x_rec - x
    total_variance = jnp.sum((x - x.mean(0)) ** 2)
    fvu = jnp.sum(e * e) / total_variance
    return x_rec, fvu


if __name__ == "__main__":
    # Small config consistent with the module: d_in=32, sae_scale_size=4 -> H=128, sae_k=4
    B, D_IN, SCALE, K = 16, 32, 4, 4
    HIDDEN = D_IN * SCALE

    key = jax.random.PRNGKey(0)
    k_x, k_w = jax.random.split(key)

    x = jax.random.normal(k_x, (B, D_IN), dtype=jnp.float32)

    # synthetic parameters mirroring nn.Linear(d_in, hidden) shapes
    w_enc = jax.random.normal(k_w, (HIDDEN, D_IN), dtype=jnp.float32) * 0.1
    b_enc = jnp.zeros((HIDDEN,), dtype=jnp.float32)          # encoder.bias.data.zero_()
    eps = jnp.finfo(jnp.float32).eps
    # W_dec = encoder.weight.clone(); set_decoder_norm_to_unit_norm (norm over dim=1)
    w_dec = w_enc / (jnp.linalg.norm(w_enc, axis=1, keepdims=True) + eps)
    b_dec = jnp.zeros((D_IN,), dtype=jnp.float32)

    x_rec, fvu = sae_forward(x, w_enc, b_enc, w_dec, b_dec, k=K)
    jax.block_until_ready(x_rec)
    jax.block_until_ready(fvu)

    x_rec_ref, fvu_ref = sae_reference(x, w_enc, b_enc, w_dec, b_dec, k=K)
    assert jnp.allclose(x_rec, x_rec_ref, rtol=5e-3, atol=5e-3), "x_rec mismatch"
    assert jnp.allclose(fvu, fvu_ref, rtol=5e-3, atol=1e-5), "fvu mismatch"

    print("KERNEL_OK")
</pallas_src>

<mosaic_0001>
module attributes {stable_mosaic.version = 11 : i64} {
  func.func @_sae_kernel(%arg0: i32, %arg1: memref<16x32xf32, #tpu.memory_space<vmem>>, %arg2: memref<1x32xf32, #tpu.memory_space<vmem>>, %arg3: memref<32x128xbf16, #tpu.memory_space<vmem>>, %arg4: memref<1x128xf32, #tpu.memory_space<vmem>>, %arg5: memref<128x32xbf16, #tpu.memory_space<vmem>>, %arg6: memref<16x32xf32, #tpu.memory_space<vmem>>, %arg7: memref<8x32xf32, #tpu.memory_space<vmem>>) attributes {dimension_semantics = [#tpu.dimension_semantics<parallel>], iteration_bounds = array<i64: 1>, scalar_prefetch = 0 : i64, scratch_operands = 0 : i64, tpu.core_type = #tpu.core_type<tc>, window_params = [{transform_indices = @transform_0, window_bounds = array<i64: 16, 32>}, {pipeline_mode = #tpu.pipeline_mode<synchronous>, transform_indices = @transform_1, window_bounds = array<i64: 1, 32>}, {pipeline_mode = #tpu.pipeline_mode<synchronous>, transform_indices = @transform_2, window_bounds = array<i64: 32, 128>}, {pipeline_mode = #tpu.pipeline_mode<synchronous>, transform_indices = @transform_3, window_bounds = array<i64: 1, 128>}, {pipeline_mode = #tpu.pipeline_mode<synchronous>, transform_indices = @transform_4, window_bounds = array<i64: 128, 32>}, {transform_indices = @transform_5, window_bounds = array<i64: 16, 32>}, {transform_indices = @transform_6, window_bounds = array<i64: 8, 32>}]} {
    %c0 = arith.constant 0 : index
    %c0_0 = arith.constant 0 : index
    %0 = vector.load %arg1[%c0, %c0_0] : memref<16x32xf32, #tpu.memory_space<vmem>>, vector<16x32xf32>
    %c0_1 = arith.constant 0 : index
    %c0_2 = arith.constant 0 : index
    %1 = vector.load %arg2[%c0_1, %c0_2] : memref<1x32xf32, #tpu.memory_space<vmem>>, vector<1x32xf32>
    %c0_3 = arith.constant 0 : index
    %c0_4 = arith.constant 0 : index
    %2 = vector.load %arg4[%c0_3, %c0_4] : memref<1x128xf32, #tpu.memory_space<vmem>>, vector<1x128xf32>
    %3 = vector.broadcast %1 : vector<1x32xf32> to vector<16x32xf32>
    %4 = arith.subf %0, %3 : vector<16x32xf32>
    %5 = arith.truncf %4 : vector<16x32xf32> to vector<16x32xbf16>
    %c0_5 = arith.constant 0 : index
    %c0_6 = arith.constant 0 : index
    %6 = vector.load %arg3[%c0_5, %c0_6] : memref<32x128xbf16, #tpu.memory_space<vmem>>, vector<32x128xbf16>
    %cst = arith.constant dense<0.000000e+00> : vector<16x128xf32>
    %7 = tpu.matmul %5, %6, %cst {dimension_numbers = #tpu.dot_dimension_numbers<[1], [0], [0], [1], [0, 0, 1, 1], [], []>} : vector<16x32xbf16>, vector<32x128xbf16>, vector<16x128xf32> -> vector<16x128xf32>
    %8 = vector.broadcast %2 : vector<1x128xf32> to vector<16x128xf32>
    %9 = arith.addf %7, %8 : vector<16x128xf32>
    %cst_7 = arith.constant 0.000000e+00 : f32
    %10 = vector.broadcast %cst_7 : f32 to vector<16x128xf32>
    %11 = arith.maximumf %9, %10 : vector<16x128xf32>
    %cst_8 = arith.constant dense<0xFF800000> : vector<16xf32>
    %12 = vector.multi_reduction <maximumf>, %11, %cst_8 [1] : vector<16x128xf32> to vector<16xf32>
    %13 = vector.shape_cast %12 : vector<16xf32> to vector<16x1xf32>
    %14 = vector.broadcast %13 : vector<16x1xf32> to vector<16x128xf32>
    %15 = arith.cmpf oge, %11, %14 : vector<16x128xf32>
    %cst_9 = arith.constant 0xFF800000 : f32
    %16 = vector.broadcast %cst_9 : f32 to vector<16x128xf32>
    %17 = arith.select %15, %16, %11 : vector<16x128xi1>, vector<16x128xf32>
    %cst_10 = arith.constant dense<0xFF800000> : vector<16xf32>
    %18 = vector.multi_reduction <maximumf>, %17, %cst_10 [1] : vector<16x128xf32> to vector<16xf32>
    %19 = vector.shape_cast %18 : vector<16xf32> to vector<16x1xf32>
    %20 = vector.broadcast %19 : vector<16x1xf32> to vector<16x128xf32>
    %21 = arith.cmpf oge, %17, %20 : vector<16x128xf32>
    %cst_11 = arith.constant 0xFF800000 : f32
    %22 = vector.broadcast %cst_11 : f32 to vector<16x128xf32>
    %23 = arith.select %21, %22, %17 : vector<16x128xi1>, vector<16x128xf32>
    %cst_12 = arith.constant dense<0xFF800000> : vector<16xf32>
    %24 = vector.multi_reduction <maximumf>, %23, %cst_12 [1] : vector<16x128xf32> to vector<16xf32>
    %25 = vector.shape_cast %24 : vector<16xf32> to vector<16x1xf32>
    %26 = vector.broadcast %25 : vector<16x1xf32> to vector<16x128xf32>
    %27 = arith.cmpf oge, %23, %26 : vector<16x128xf32>
    %cst_13 = arith.constant 0xFF800000 : f32
    %28 = vector.broadcast %cst_13 : f32 to vector<16x128xf32>
    %29 = arith.select %27, %28, %23 : vector<16x128xi1>, vector<16x128xf32>
    %cst_14 = arith.constant dense<0xFF800000> : vector<16xf32>
    %30 = vector.multi_reduction <maximumf>, %29, %cst_14 [1] : vector<16x128xf32> to vector<16xf32>
    %31 = vector.shape_cast %30 : vector<16xf32> to vector<16x1xf32>
    %32 = vector.broadcast %31 : vector<16x1xf32> to vector<16x128xf32>
    %33 = arith.cmpf oge, %11, %32 : vector<16x128xf32>
    %cst_15 = arith.constant 0.000000e+00 : f32
    %34 = vector.broadcast %cst_15 : f32 to vector<16x128xf32>
    %35 = arith.select %33, %11, %34 : vector<16x128xi1>, vector<16x128xf32>
    %36 = arith.truncf %35 : vector<16x128xf32> to vector<16x128xbf16>
    %c0_16 = arith.constant 0 : index
    %c0_17 = arith.constant 0 : index
    %37 = vector.load %arg5[%c0_16, %c0_17] : memref<128x32xbf16, #tpu.memory_space<vmem>>, vector<128x32xbf16>
    %cst_18 = arith.constant dense<0.000000e+00> : vector<16x32xf32>
    %38 = tpu.matmul %36, %37, %cst_18 {dimension_numbers = #tpu.dot_dimension_numbers<[1], [0], [0], [1], [0, 0, 1, 1], [], []>} : vector<16x128xbf16>, vector<128x32xbf16>, vector<16x32xf32> -> vector<16x32xf32>
    %39 = vector.broadcast %1 : vector<1x32xf32> to vector<16x32xf32>
    %40 = arith.addf %38, %39 : vector<16x32xf32>
    %c0_19 = arith.constant 0 : index
    %c0_20 = arith.constant 0 : index
    %41 = vector.load %arg6[%c0_19, %c0_20] : memref<16x32xf32, #tpu.memory_space<vmem>>, vector<16x32xf32>
    tpu.vector_store %arg6[%c0_19, %c0_20], %40 {strides = array<i32>} : memref<16x32xf32, #tpu.memory_space<vmem>>, vector<16x32xf32>,
    %42 = arith.subf %40, %0 : vector<16x32xf32>
    %cst_21 = arith.constant dense<0.000000e+00> : vector<32xf32>
    %43 = vector.multi_reduction <add>, %0, %cst_21 [0] : vector<16x32xf32> to vector<32xf32>
    %44 = vector.shape_cast %43 : vector<32xf32> to vector<1x32xf32>
    %45 = arith.mulf %0, %0 : vector<16x32xf32>
    %cst_22 = arith.constant dense<0.000000e+00> : vector<32xf32>
    %46 = vector.multi_reduction <add>, %45, %cst_22 [0] : vector<16x32xf32> to vector<32xf32>
    %47 = vector.shape_cast %46 : vector<32xf32> to vector<1x32xf32>
    %48 = arith.mulf %42, %42 : vector<16x32xf32>
    %cst_23 = arith.constant dense<0.000000e+00> : vector<32xf32>
    %49 = vector.multi_reduction <add>, %48, %cst_23 [0] : vector<16x32xf32> to vector<32xf32>
    %50 = vector.shape_cast %49 : vector<32xf32> to vector<1x32xf32>
    %51 = tpu.iota {dimensions = array<i32: 0>} : vector<8x32xi32>
    %c0_i32 = arith.constant 0 : i32
    %52 = vector.broadcast %c0_i32 : i32 to vector<8x32xi32>
    %53 = arith.cmpi eq, %51, %52 : vector<8x32xi32>
    %c1_i32 = arith.constant 1 : i32
    %54 = vector.broadcast %c1_i32 : i32 to vector<8x32xi32>
    %55 = arith.cmpi eq, %51, %54 : vector<8x32xi32>
    %c2_i32 = arith.constant 2 : i32
    %56 = vector.broadcast %c2_i32 : i32 to vector<8x32xi32>
    %57 = arith.cmpi eq, %51, %56 : vector<8x32xi32>
    %cst_24 = arith.constant 0.000000e+00 : f32
    %58 = vector.shape_cast %50 : vector<1x32xf32> to vector<1x32xf32>
    %59 = vector.broadcast %58 : vector<1x32xf32> to vector<8x32xf32>
    %60 = vector.broadcast %cst_24 : f32 to vector<8x32xf32>
    %61 = arith.select %57, %59, %60 : vector<8x32xi1>, vector<8x32xf32>
    %62 = vector.shape_cast %47 : vector<1x32xf32> to vector<1x32xf32>
    %63 = vector.broadcast %62 : vector<1x32xf32> to vector<8x32xf32>
    %64 = arith.select %55, %63, %61 : vector<8x32xi1>, vector<8x32xf32>
    %65 = vector.shape_cast %44 : vector<1x32xf32> to vector<1x32xf32>
    %66 = vector.broadcast %65 : vector<1x32xf32> to vector<8x32xf32>
    %67 = arith.select %53, %66, %64 : vector<8x32xi1>, vector<8x32xf32>
    %c0_25 = arith.constant 0 : index
    %c0_26 = arith.constant 0 : index
    %68 = vector.load %arg7[%c0_25, %c0_26] : memref<8x32xf32, #tpu.memory_space<vmem>>, vector<8x32xf32>
    tpu.vector_store %arg7[%c0_25, %c0_26], %67 {strides = array<i32>} : memref<8x32xf32, #tpu.memory_space<vmem>>, vector<8x32xf32>,
    return
  }
  func.func @transform_0(%arg0: i32) -> (i32, i32) {
    %c0_i32 = arith.constant 0 : i32
    %c0_i32_0 = arith.constant 0 : i32
    return %arg0, %c0_i32 : i32, i32
  }
  func.func @transform_1(%arg0: i32) -> (i32, i32) {
    %c0_i32 = arith.constant 0 : i32
    %c0_i32_0 = arith.constant 0 : i32
    %c0_i32_1 = arith.constant 0 : i32
    return %c0_i32, %c0_i32_0 : i32, i32
  }
  func.func @transform_2(%arg0: i32) -> (i32, i32) {
    %c0_i32 = arith.constant 0 : i32
    %c0_i32_0 = arith.constant 0 : i32
    %c0_i32_1 = arith.constant 0 : i32
    return %c0_i32, %c0_i32_0 : i32, i32
  }
  func.func @transform_3(%arg0: i32) -> (i32, i32) {
    %c0_i32 = arith.constant 0 : i32
    %c0_i32_0 = arith.constant 0 : i32
    %c0_i32_1 = arith.constant 0 : i32
    return %c0_i32, %c0_i32_0 : i32, i32
  }
  func.func @transform_4(%arg0: i32) -> (i32, i32) {
    %c0_i32 = arith.constant 0 : i32
    %c0_i32_0 = arith.constant 0 : i32
    %c0_i32_1 = arith.constant 0 : i32
    return %c0_i32, %c0_i32_0 : i32, i32
  }
  func.func @transform_5(%arg0: i32) -> (i32, i32) {
    %c0_i32 = arith.constant 0 : i32
    %c0_i32_0 = arith.constant 0 : i32
    return %arg0, %c0_i32 : i32, i32
  }
  func.func @transform_6(%arg0: i32) -> (i32, i32) {
    %c0_i32 = arith.constant 0 : i32
    %c0_i32_0 = arith.constant 0 : i32
    return %arg0, %c0_i32 : i32, i32
  }
}

module attributes {stable_mosaic.version = 11 : i64} {
  func.func @_sae_kernel(%arg0: i32, %arg1: memref<16x32xf32, #tpu.memory_space<vmem>>, %arg2: memref<1x32xf32, #tpu.memory_space<vmem>>, %arg3: memref<32x128xbf16, #tpu.memory_space<vmem>>, %arg4: memref<1x128xf32, #tpu.memory_space<vmem>>, %arg5: memref<128x32xbf16, #tpu.memory_space<vmem>>, %arg6: memref<16x32xf32, #tpu.memory_space<vmem>>, %arg7: memref<8x32xf32, #tpu.memory_space<vmem>>) attributes {dimension_semantics = [#tpu.dimension_semantics<parallel>], iteration_bounds = array<i64: 1>, scalar_prefetch = 0 : i64, scratch_operands = 0 : i64, tpu.core_type = #tpu.core_type<tc>, window_params = [{transform_indices = @transform_0, window_bounds = array<i64: 16, 32>}, {pipeline_mode = #tpu.pipeline_mode<synchronous>, transform_indices = @transform_1, window_bounds = array<i64: 1, 32>}, {pipeline_mode = #tpu.pipeline_mode<synchronous>, transform_indices = @transform_2, window_bounds = array<i64: 32, 128>}, {pipeline_mode = #tpu.pipeline_mode<synchronous>, transform_indices = @transform_3, window_bounds = array<i64: 1, 128>}, {pipeline_mode = #tpu.pipeline_mode<synchronous>, transform_indices = @transform_4, window_bounds = array<i64: 128, 32>}, {transform_indices = @transform_5, window_bounds = array<i64: 16, 32>}, {transform_indices = @transform_6, window_bounds = array<i64: 8, 32>}]} {
    %c0 = arith.constant 0 : index
    %c0_0 = arith.constant 0 : index
    %0 = vector.load %arg1[%c0, %c0_0] : memref<16x32xf32, #tpu.memory_space<vmem>>, vector<16x32xf32>
    %c0_1 = arith.constant 0 : index
    %c0_2 = arith.constant 0 : index
    %1 = vector.load %arg2[%c0_1, %c0_2] : memref<1x32xf32, #tpu.memory_space<vmem>>, vector<1x32xf32>
    %c0_3 = arith.constant 0 : index
    %c0_4 = arith.constant 0 : index
    %2 = vector.load %arg4[%c0_3, %c0_4] : memref<1x128xf32, #tpu.memory_space<vmem>>, vector<1x128xf32>
    %3 = vector.broadcast %1 : vector<1x32xf32> to vector<16x32xf32>
    %4 = arith.subf %0, %3 : vector<16x32xf32>
    %5 = arith.truncf %4 : vector<16x32xf32> to vector<16x32xbf16>
    %c0_5 = arith.constant 0 : index
    %c0_6 = arith.constant 0 : index
    %6 = vector.load %arg3[%c0_5, %c0_6] : memref<32x128xbf16, #tpu.memory_space<vmem>>, vector<32x128xbf16>
    %cst = arith.constant dense<0.000000e+00> : vector<16x128xf32>
    %7 = tpu.matmul %5, %6, %cst {dimension_numbers = #tpu.dot_dimension_numbers<[1], [0], [0], [1], [0, 0, 1, 1], [], []>} : vector<16x32xbf16>, vector<32x128xbf16>, vector<16x128xf32> -> vector<16x128xf32>
    %8 = vector.broadcast %2 : vector<1x128xf32> to vector<16x128xf32>
    %9 = arith.addf %7, %8 : vector<16x128xf32>
    %cst_7 = arith.constant 0.000000e+00 : f32
    %10 = vector.broadcast %cst_7 : f32 to vector<16x128xf32>
    %11 = arith.maximumf %9, %10 : vector<16x128xf32>
    %cst_8 = arith.constant dense<0xFF800000> : vector<16xf32>
    %12 = vector.multi_reduction <maximumf>, %11, %cst_8 [1] : vector<16x128xf32> to vector<16xf32>
    %13 = vector.shape_cast %12 : vector<16xf32> to vector<16x1xf32>
    %14 = vector.broadcast %13 : vector<16x1xf32> to vector<16x128xf32>
    %15 = arith.cmpf oge, %11, %14 : vector<16x128xf32>
    %cst_9 = arith.constant 0xFF800000 : f32
    %16 = vector.broadcast %cst_9 : f32 to vector<16x128xf32>
    %17 = arith.select %15, %16, %11 : vector<16x128xi1>, vector<16x128xf32>
    %cst_10 = arith.constant dense<0xFF800000> : vector<16xf32>
    %18 = vector.multi_reduction <maximumf>, %17, %cst_10 [1] : vector<16x128xf32> to vector<16xf32>
    %19 = vector.shape_cast %18 : vector<16xf32> to vector<16x1xf32>
    %20 = vector.broadcast %19 : vector<16x1xf32> to vector<16x128xf32>
    %21 = arith.cmpf oge, %17, %20 : vector<16x128xf32>
    %cst_11 = arith.constant 0xFF800000 : f32
    %22 = vector.broadcast %cst_11 : f32 to vector<16x128xf32>
    %23 = arith.select %21, %22, %17 : vector<16x128xi1>, vector<16x128xf32>
    %cst_12 = arith.constant dense<0xFF800000> : vector<16xf32>
    %24 = vector.multi_reduction <maximumf>, %23, %cst_12 [1] : vector<16x128xf32> to vector<16xf32>
    %25 = vector.shape_cast %24 : vector<16xf32> to vector<16x1xf32>
    %26 = vector.broadcast %25 : vector<16x1xf32> to vector<16x128xf32>
    %27 = arith.cmpf oge, %23, %26 : vector<16x128xf32>
    %cst_13 = arith.constant 0xFF800000 : f32
    %28 = vector.broadcast %cst_13 : f32 to vector<16x128xf32>
    %29 = arith.select %27, %28, %23 : vector<16x128xi1>, vector<16x128xf32>
    %cst_14 = arith.constant dense<0xFF800000> : vector<16xf32>
    %30 = vector.multi_reduction <maximumf>, %29, %cst_14 [1] : vector<16x128xf32> to vector<16xf32>
    %31 = vector.shape_cast %30 : vector<16xf32> to vector<16x1xf32>
    %32 = vector.broadcast %31 : vector<16x1xf32> to vector<16x128xf32>
    %33 = arith.cmpf oge, %11, %32 : vector<16x128xf32>
    %cst_15 = arith.constant 0.000000e+00 : f32
    %34 = vector.broadcast %cst_15 : f32 to vector<16x128xf32>
    %35 = arith.select %33, %11, %34 : vector<16x128xi1>, vector<16x128xf32>
    %36 = arith.truncf %35 : vector<16x128xf32> to vector<16x128xbf16>
    %c0_16 = arith.constant 0 : index
    %c0_17 = arith.constant 0 : index
    %37 = vector.load %arg5[%c0_16, %c0_17] : memref<128x32xbf16, #tpu.memory_space<vmem>>, vector<128x32xbf16>
    %cst_18 = arith.constant dense<0.000000e+00> : vector<16x32xf32>
    %38 = tpu.matmul %36, %37, %cst_18 {dimension_numbers = #tpu.dot_dimension_numbers<[1], [0], [0], [1], [0, 0, 1, 1], [], []>} : vector<16x128xbf16>, vector<128x32xbf16>, vector<16x32xf32> -> vector<16x32xf32>
    %39 = vector.broadcast %1 : vector<1x32xf32> to vector<16x32xf32>
    %40 = arith.addf %38, %39 : vector<16x32xf32>
    %c0_19 = arith.constant 0 : index
    %c0_20 = arith.constant 0 : index
    %41 = vector.load %arg6[%c0_19, %c0_20] : memref<16x32xf32, #tpu.memory_space<vmem>>, vector<16x32xf32>
    tpu.vector_store %arg6[%c0_19, %c0_20], %40 {strides = array<i32>} : memref<16x32xf32, #tpu.memory_space<vmem>>, vector<16x32xf32>,
    %42 = arith.subf %40, %0 : vector<16x32xf32>
    %cst_21 = arith.constant dense<0.000000e+00> : vector<32xf32>
    %43 = vector.multi_reduction <add>, %0, %cst_21 [0] : vector<16x32xf32> to vector<32xf32>
    %44 = vector.shape_cast %43 : vector<32xf32> to vector<1x32xf32>
    %45 = arith.mulf %0, %0 : vector<16x32xf32>
    %cst_22 = arith.constant dense<0.000000e+00> : vector<32xf32>
    %46 = vector.multi_reduction <add>, %45, %cst_22 [0] : vector<16x32xf32> to vector<32xf32>
    %47 = vector.shape_cast %46 : vector<32xf32> to vector<1x32xf32>
    %48 = arith.mulf %42, %42 : vector<16x32xf32>
    %cst_23 = arith.constant dense<0.000000e+00> : vector<32xf32>
    %49 = vector.multi_reduction <add>, %48, %cst_23 [0] : vector<16x32xf32> to vector<32xf32>
    %50 = vector.shape_cast %49 : vector<32xf32> to vector<1x32xf32>
    %51 = tpu.iota {dimensions = array<i32: 0>} : vector<8x32xi32>
    %c0_i32 = arith.constant 0 : i32
    %52 = vector.broadcast %c0_i32 : i32 to vector<8x32xi32>
    %53 = arith.cmpi eq, %51, %52 : vector<8x32xi32>
    %c1_i32 = arith.constant 1 : i32
    %54 = vector.broadcast %c1_i32 : i32 to vector<8x32xi32>
    %55 = arith.cmpi eq, %51, %54 : vector<8x32xi32>
    %c2_i32 = arith.constant 2 : i32
    %56 = vector.broadcast %c2_i32 : i32 to vector<8x32xi32>
    %57 = arith.cmpi eq, %51, %56 : vector<8x32xi32>
    %cst_24 = arith.constant 0.000000e+00 : f32
    %58 = vector.shape_cast %50 : vector<1x32xf32> to vector<1x32xf32>
    %59 = vector.broadcast %58 : vector<1x32xf32> to vector<8x32xf32>
    %60 = vector.broadcast %cst_24 : f32 to vector<8x32xf32>
    %61 = arith.select %57, %59, %60 : vector<8x32xi1>, vector<8x32xf32>
    %62 = vector.shape_cast %47 : vector<1x32xf32> to vector<1x32xf32>
    %63 = vector.broadcast %62 : vector<1x32xf32> to vector<8x32xf32>
    %64 = arith.select %55, %63, %61 : vector<8x32xi1>, vector<8x32xf32>
    %65 = vector.shape_cast %44 : vector<1x32xf32> to vector<1x32xf32>
    %66 = vector.broadcast %65 : vector<1x32xf32> to vector<8x32xf32>
    %67 = arith.select %53, %66, %64 : vector<8x32xi1>, vector<8x32xf32>
    %c0_25 = arith.constant 0 : index
    %c0_26 = arith.constant 0 : index
    %68 = vector.load %arg7[%c0_25, %c0_26] : memref<8x32xf32, #tpu.memory_space<vmem>>, vector<8x32xf32>
    tpu.vector_store %arg7[%c0_25, %c0_26], %67 {strides = array<i32>} : memref<8x32xf32, #tpu.memory_space<vmem>>, vector<8x32xf32>,
    return
  }
  func.func @transform_0(%arg0: i32) -> (i32, i32) {
    %c0_i32 = arith.constant 0 : i32
    %c0_i32_0 = arith.constant 0 : i32
    return %arg0, %c0_i32 : i32, i32
  }
  func.func @transform_1(%arg0: i32) -> (i32, i32) {
    %c0_i32 = arith.constant 0 : i32
    %c0_i32_0 = arith.constant 0 : i32
    %c0_i32_1 = arith.constant 0 : i32
    return %c0_i32, %c0_i32_0 : i32, i32
  }
  func.func @transform_2(%arg0: i32) -> (i32, i32) {
    %c0_i32 = arith.constant 0 : i32
    %c0_i32_0 = arith.constant 0 : i32
    %c0_i32_1 = arith.constant 0 : i32
    return %c0_i32, %c0_i32_0 : i32, i32
  }
  func.func @transform_3(%arg0: i32) -> (i32, i32) {
    %c0_i32 = arith.constant 0 : i32
    %c0_i32_0 = arith.constant 0 : i32
    %c0_i32_1 = arith.constant 0 : i32
    return %c0_i32, %c0_i32_0 : i32, i32
  }
  func.func @transform_4(%arg0: i32) -> (i32, i32) {
    %c0_i32 = arith.constant 0 : i32
    %c0_i32_0 = arith.constant 0 : i32
    %c0_i32_1 = arith.constant 0 : i32
    return %c0_i32, %c0_i32_0 : i32, i32
  }
  func.func @transform_5(%arg0: i32) -> (i32, i32) {
    %c0_i32 = arith.constant 0 : i32
    %c0_i32_0 = arith.constant 0 : i32
    return %arg0, %c0_i32 : i32, i32
  }
  func.func @transform_6(%arg0: i32) -> (i32, i32) {
    %c0_i32 = arith.constant 0 : i32
    %c0_i32_0 = arith.constant 0 : i32
    return %arg0, %c0_i32 : i32, i32
  }
}

</mosaic_0001>

<llo_original>
// kernel: tpu_custom_call.1
$region0: #{tpu_custom_call.1}
  #allocation0 [shape = 'u32[]', space=smem, size = 0x4, offset = 0x4, fixed_abs, tag = 'smem constant byte address 0x4 - core index']
  #allocation1 [shape = 'u32[144,128]{1,0:T(1,128)}', space=vmem, size = 0x12000, scoped, tag = 'internal scratch']
  %s0 = inlined_call_operand.vmem [shape: f32[16,32], index: 0, kind: input, shape index: {}]
  %s1 = inlined_call_operand.vmem [shape: f32[1,32], index: 1, kind: input, shape index: {}]
  %s2 = inlined_call_operand.vmem [shape: bf16[32,128], index: 2, kind: input, shape index: {}]
  %s3 = inlined_call_operand.vmem [shape: f32[1,128], index: 3, kind: input, shape index: {}]
  %s4 = inlined_call_operand.vmem [shape: bf16[128,32], index: 4, kind: input, shape index: {}]
  %s5 = inlined_call_operand.hbm [shape: f32[16,32], index: 5, kind: output, shape index: {0}]
  %s6 = inlined_call_operand.hbm [shape: f32[8,32], index: 6, kind: output, shape index: {1}]
  %7 = xla_tuple %s5, %s6
  %s8 = sld [smem:[#allocation0]]
  $region38: #{tpu_custom_call.1} parent=0
    _
  %s10 = ssub.s32 1, %s8
  %s11 = scalar_select 0, %s10, %s8
  $region1: #{tpu_custom_call.1} parent=0
    #allocation2 [shape = 'u8[8192]{0}', space=vmem, size = 0x2000, scoped, tag = 'output window, operand 0, single buffered']
    #allocation3 [shape = 's32[1]{0}', space=sflag, size = 0x4, scoped, tag = 'scoped memory for tpu_custom_call.1']
    #allocation4 [shape = 'u8[4096]{0}', space=vmem, size = 0x1000, scoped, tag = 'output window, operand 1, single buffered']
    #allocation5 [shape = 's32[1]{0}', space=sflag, size = 0x4, scoped, tag = 'scoped memory for tpu_custom_call.1']
    %12 = vsyncpa [#allocation3], 0
    %13 = vsyncpa [#allocation5], 0
    // Predicated region
    $region2: #{tpu_custom_call.1} parent=1 // pred_check
      _
    $region3: #{tpu_custom_call.1} parent=1 // pred_check_branch
      %15 = sbr.rel (0) target = $region5
    $region4: #{tpu_custom_call.1} parent=1 // pred_region
      _
    $region5: #{tpu_custom_call.1} parent=1 // pred_fallthru
      _
    // Predicated region
    $region6: #{tpu_custom_call.1} parent=1 // pred_check
      _
    $region7: #{tpu_custom_call.1} parent=1 // pred_check_branch
      %17 = sbr.rel (0) target = $region9
    $region8: #{tpu_custom_call.1} parent=1 // pred_region
      _
    $region9: #{tpu_custom_call.1} parent=1 // pred_fallthru
      _
    // Predicated region
    $region10: #{tpu_custom_call.1} parent=1 // pred_check
      _
    $region11: #{tpu_custom_call.1} parent=1 // pred_check_branch
      %19 = sbr.rel (0) target = $region13
    $region12: #{tpu_custom_call.1} parent=1 // pred_region
      _
    $region13: #{tpu_custom_call.1} parent=1 // pred_fallthru
      _
    // Predicated region
    $region14: #{tpu_custom_call.1} parent=1 // pred_check
      _
    $region15: #{tpu_custom_call.1} parent=1 // pred_check_branch
      %21 = sbr.rel (0) target = $region17
    $region16: #{tpu_custom_call.1} parent=1 // pred_region
      _
    $region17: #{tpu_custom_call.1} parent=1 // pred_fallthru
      _
    // Predicated region
    $region18: #{tpu_custom_call.1} parent=1 // pred_check
      _
    $region19: #{tpu_custom_call.1} parent=1 // pred_check_branch
      %23 = sbr.rel (0) target = $region21
    $region20: #{tpu_custom_call.1} parent=1 // pred_region
      _
    $region21: #{tpu_custom_call.1} parent=1 // pred_fallthru
      _
    %v25 = vld [vmem:[%s0] sm:$0xff]
    %v26 = vld [vmem:[%s0 + $0x8] sm:$0xff]
    %v27 = vld [vmem:[%s1] sm:$0x1]
    %v28 = vld [vmem:[%s3] sm:$0x1]
    %v30 = vlaneseq
    %v31 = vshrl.u32 %v30, 7
    %v32 = vsub.s32 0, %v31
    %v33 = vrot.slane %v27, %v32
    %v35 = vsub.f32 %v25, %v33
    %v36 = vsub.f32 %v26, %v33
    %v37 = vpack.c.bf16 %v36, %v35
    %v38 = vld [vmem:[%s2] sm:$0xf]
    %v39 = vld [vmem:[%s2 + $0x4] sm:$0xf]
    %v40 = vld [vmem:[%s2 + $0x8] sm:$0xf]
    %v41 = vld [vmem:[%s2 + $0xc] sm:$0xf]
    %v43 = vlaneseq
    %v44 = vshrl.u32 %v43, 7
    %v45 = vsub.s32 0, %v44
    %v46 = vrot.slane %v28, %v45
    %v52 = vunpack.c.l.b16 %v38
    %v53 = vunpack.c.l.b16 %v39
    %v54 = vunpack.c.l.b16 %v40
    %v55 = vunpack.c.l.b16 %v41
    %v56 = vpack.c.b16 %v53, %v52
    %v57 = vpack.c.b16 %v55, %v54
    %vm60 = vcmask 261120
    %v62 = vsel %vm60, %v37, 0
    %64 = vmatprep.subr.bf16.mxu0 0
    %65 = vmatpush1.bf16.msra.mxu0 %v56
    %66 = vmatprep.subr.bf16.mxu0 0
    %67 = vmatpush1.bf16.msra.mxu0 %v57
    %68 = vmatprep.subr.bf16.mxu0 0
    %69 = vmatpush1.bf16.msra.mxu0 0
    %70 = vmatprep.subr.bf16.mxu0 0
    %71 = vmatpush1.bf16.msra.mxu0 0
    %72 = vmatprep.subr.bf16.mxu0 0
    %73 = vmatpush1.bf16.msra.mxu0 0
    %74 = vmatprep.subr.bf16.mxu0 0
    %75 = vmatpush1.bf16.msra.mxu0 0
    %76 = vmatprep.subr.bf16.mxu0 0
    %77 = vmatpush1.bf16.msra.mxu0 0
    %78 = vmatprep.subr.bf16.mxu0 0
    %79 = vmatpush1.bf16.msra.mxu0 0
    %80 = vmatprep.subr.bf16.mxu0 0
    %81 = vmatpush1.bf16.msra.mxu0 0
    %82 = vmatprep.subr.bf16.mxu0 0
    %83 = vmatpush1.bf16.msra.mxu0 0
    %84 = vmatprep.subr.bf16.mxu0 0
    %85 = vmatpush1.bf16.msra.mxu0 0
    %86 = vmatprep.subr.bf16.mxu0 0
    %87 = vmatpush1.bf16.msra.mxu0 0
    %88 = vmatprep.subr.bf16.mxu0 0
    %89 = vmatpush1.bf16.msra.mxu0 0
    %90 = vmatprep.subr.bf16.mxu0 0
    %91 = vmatpush1.bf16.msra.mxu0 0
    %92 = vmatprep.subr.bf16.mxu0 0
    %93 = vmatpush1.bf16.msra.mxu0 0
    %94 = vmatprep.subr.bf16.mxu0 0
    %95 = vmatpush1.bf16.msra.mxu0 0
    %96 = vmatprep.mubr.bf16.mxu0 0
    %97 = vmatmul.mubr.bf16.gmra.mrb[0].mxu0 %v62
    %v98 = vpop.f32.mrb[0].mxu0
    %v99 = vadd.f32 %v46, %v98
    %v100 = vpop.f32.mrb[0].mxu0
    %v101 = vpop.f32.mrb[0].mxu0
    %v102 = vadd.f32 %v46, %v101
    %v103 = vpop.f32.mrb[0].mxu0
    %104 = vdwg.mxu0
    %v105 = vmax.f32 %v99, 0.0
    %v106 = vmax.f32 %v102, 0.0
    %107 = vmax.xlane.f32.xlu0 %v105
    %v108 = vpop.xlane.xlu0 %107
    %109 = vmax.xlane.f32.xlu0 %v106
    %v110 = vpop.xlane.xlu0 %109
    %vm111 = vcmp.ge.f32.partialorder %v105, %v108
    %vm112 = vcmp.ge.f32.partialorder %v106, %v110
    %v113 = vsel %vm111, -inf, %v105
    %v114 = vsel %vm112, -inf, %v106
    %115 = vmax.xlane.f32.xlu0 %v113
    %v116 = vpop.xlane.xlu0 %115
    %117 = vmax.xlane.f32.xlu0 %v114
    %v118 = vpop.xlane.xlu0 %117
    %vm119 = vcmp.ge.f32.partialorder %v113, %v116
    %vm120 = vcmp.ge.f32.partialorder %v114, %v118
    %v121 = vsel %vm119, -inf, %v113
    %v122 = vsel %vm120, -inf, %v114
    %123 = vmax.xlane.f32.xlu0 %v121
    %v124 = vpop.xlane.xlu0 %123
    %125 = vmax.xlane.f32.xlu0 %v122
    %v126 = vpop.xlane.xlu0 %125
    %vm127 = vcmp.ge.f32.partialorder %v121, %v124
    %vm128 = vcmp.ge.f32.partialorder %v122, %v126
    %v129 = vsel %vm127, -inf, %v121
    %v130 = vsel %vm128, -inf, %v122
    %131 = vmax.xlane.f32.xlu0 %v129
    %v132 = vpop.xlane.xlu0 %131
    %133 = vmax.xlane.f32.xlu0 %v130
    %v134 = vpop.xlane.xlu0 %133
    %vm135 = vcmp.ge.f32.partialorder %v105, %v132
    %vm136 = vcmp.ge.f32.partialorder %v106, %v134
    %v137 = vsel %vm135, %v105, 0.0
    %v138 = vsel %vm136, %v106, 0.0
    %v139 = vpack.c.bf16 %v138, %v137
    %v140 = vld [vmem:[%s4] sm:$0xf]
    %v141 = vld [vmem:[%s4 + $0x4] sm:$0xf]
    %v142 = vld [vmem:[%s4 + $0x8] sm:$0xf]
    %v143 = vld [vmem:[%s4 + $0xc] sm:$0xf]
    %v144 = vld [vmem:[%s4 + $0x10] sm:$0xf]
    %v145 = vld [vmem:[%s4 + $0x14] sm:$0xf]
    %v146 = vld [vmem:[%s4 + $0x18] sm:$0xf]
    %v147 = vld [vmem:[%s4 + $0x1c] sm:$0xf]
    %v148 = vld [vmem:[%s4 + $0x20] sm:$0xf]
    %v149 = vld [vmem:[%s4 + $0x24] sm:$0xf]
    %v150 = vld [vmem:[%s4 + $0x28] sm:$0xf]
    %v151 = vld [vmem:[%s4 + $0x2c] sm:$0xf]
    %v152 = vld [vmem:[%s4 + $0x30] sm:$0xf]
    %v153 = vld [vmem:[%s4 + $0x34] sm:$0xf]
    %v154 = vld [vmem:[%s4 + $0x38] sm:$0xf]
    %v155 = vld [vmem:[%s4 + $0x3c] sm:$0xf]
    %v172 = vunpack.c.l.b16 %v140
    %v173 = vunpack.c.l.b16 %v141
    %v174 = vunpack.c.l.b16 %v142
    %v175 = vunpack.c.l.b16 %v143
    %v176 = vunpack.c.l.b16 %v144
    %v177 = vunpack.c.l.b16 %v145
    %v178 = vunpack.c.l.b16 %v146
    %v179 = vunpack.c.l.b16 %v147
    %v180 = vunpack.c.l.b16 %v148
    %v181 = vunpack.c.l.b16 %v149
    %v182 = vunpack.c.l.b16 %v150
    %v183 = vunpack.c.l.b16 %v151
    %v184 = vunpack.c.l.b16 %v152
    %v185 = vunpack.c.l.b16 %v153
    %v186 = vunpack.c.l.b16 %v154
    %v187 = vunpack.c.l.b16 %v155
    %v188 = vpack.c.b16 %v173, %v172
    %v189 = vpack.c.b16 %v175, %v174
    %v190 = vpack.c.b16 %v177, %v176
    %v191 = vpack.c.b16 %v179, %v178
    %v192 = vpack.c.b16 %v181, %v180
    %v193 = vpack.c.b16 %v183, %v182
    %v194 = vpack.c.b16 %v185, %v184
    %v195 = vpack.c.b16 %v187, %v186
    %204 = vmatprep.subr.bf16.mxu0 0
    %205 = vmatpush1.bf16.msra.mxu0 %v188
    %206 = vmatprep.subr.bf16.mxu0 0
    %207 = vmatpush1.bf16.msra.mxu0 %v189
    %208 = vmatprep.subr.bf16.mxu0 0
    %209 = vmatpush1.bf16.msra.mxu0 %v190
    %210 = vmatprep.subr.bf16.mxu0 0
    %211 = vmatpush1.bf16.msra.mxu0 %v191
    %212 = vmatprep.subr.bf16.mxu0 0
    %213 = vmatpush1.bf16.msra.mxu0 %v192
    %214 = vmatprep.subr.bf16.mxu0 0
    %215 = vmatpush1.bf16.msra.mxu0 %v193
    %216 = vmatprep.subr.bf16.mxu0 0
    %217 = vmatpush1.bf16.msra.mxu0 %v194
    %218 = vmatprep.subr.bf16.mxu0 0
    %219 = vmatpush1.bf16.msra.mxu0 %v195
    %220 = vmatprep.subr.bf16.mxu0 0
    %221 = vmatpush1.bf16.msra.mxu0 0
    %222 = vmatprep.subr.bf16.mxu0 0
    %223 = vmatpush1.bf16.msra.mxu0 0
    %224 = vmatprep.subr.bf16.mxu0 0
    %225 = vmatpush1.bf16.msra.mxu0 0
    %226 = vmatprep.subr.bf16.mxu0 0
    %227 = vmatpush1.bf16.msra.mxu0 0
    %228 = vmatprep.subr.bf16.mxu0 0
    %229 = vmatpush1.bf16.msra.mxu0 0
    %230 = vmatprep.subr.bf16.mxu0 0
    %231 = vmatpush1.bf16.msra.mxu0 0
    %232 = vmatprep.subr.bf16.mxu0 0
    %233 = vmatpush1.bf16.msra.mxu0 0
    %234 = vmatprep.subr.bf16.mxu0 0
    %235 = vmatpush1.bf16.msra.mxu0 0
    %236 = vmatprep.mubr.bf16.mxu0 0
    %237 = vmatmul.mubr.bf16.gmra.mrb[0].mxu0 %v139
    %v238 = vpop.f32.mrb[0].mxu0
    %v239 = vadd.f32 %v33, %v238
    %v240 = vpop.f32.mrb[0].mxu0
    %v241 = vpop.f32.mrb[0].mxu0
    %v242 = vadd.f32 %v33, %v241
    %v243 = vpop.f32.mrb[0].mxu0
    %244 = vdwg.mxu0
    %245 = vst.msk [vmem:[#allocation2] sm:$0xff] %vm60, %v239
    %246 = vst.msk [vmem:[#allocation2 + $0x8] sm:$0xff] %vm60, %v242
    %v247 = vsub.f32 %v239, %v25
    %v248 = vsub.f32 %v242, %v26
    %v249 = vsel %vm60, %v25, 0.0
    %v250 = vsel %vm60, %v26, 0.0
    %v251 = vadd.f32 %v249, %v250
    %v252 = vrot.slane %v251, 4
    %v253 = vadd.f32 %v251, %v252
    %v254 = vrot.slane %v253, 2
    %v255 = vadd.f32 %v253, %v254
    %v256 = vrot.slane %v255, 1
    %v257 = vadd.f32 %v255, %v256
    %v258 = vmul.f32 %v25, %v25
    %v259 = vmul.f32 %v26, %v26
    %v260 = vsel %vm60, %v258, 0.0
    %v261 = vsel %vm60, %v259, 0.0
    %v262 = vadd.f32 %v260, %v261
    %v263 = vrot.slane %v262, 4
    %v264 = vadd.f32 %v262, %v263
    %v265 = vrot.slane %v264, 2
    %v266 = vadd.f32 %v264, %v265
    %v267 = vrot.slane %v266, 1
    %v268 = vadd.f32 %v266, %v267
    %v269 = vmul.f32 %v247, %v247
    %v270 = vmul.f32 %v248, %v248
    %v271 = vsel %vm60, %v269, 0.0
    %v272 = vsel %vm60, %v270, 0.0
    %v273 = vadd.f32 %v271, %v272
    %v274 = vrot.slane %v273, 4
    %v275 = vadd.f32 %v273, %v274
    %v276 = vrot.slane %v275, 2
    %v277 = vadd.f32 %v275, %v276
    %v278 = vrot.slane %v277, 1
    %v279 = vadd.f32 %v277, %v278
    %v280 = vlaneseq
    %v281 = vshrl.u32 %v280, 7
    %vm282 = vcmp.eq.s32.totalorder %v281, 0
    %vm283 = vcmp.eq.s32.totalorder %v281, 1
    %vm284 = vcmp.eq.s32.totalorder %v281, 2
    %v285 = vsel %vm284, %v279, 0.0
    %v286 = vsel %vm283, %v268, %v285
    %v287 = vsel %vm282, %v257, %v286
    %288 = vst.msk [vmem:[#allocation4] sm:$0xff] %vm60, %v287
    // Predicated region
    $region22: #{tpu_custom_call.1} parent=1 // pred_check
      _
    $region23: #{tpu_custom_call.1} parent=1 // pred_check_branch
      %290 = sbr.rel (0) target = $region25
    $region24: #{tpu_custom_call.1} parent=1 // pred_region
      %s292 = ssub.s32 256, 256
      %293 = vsyncadd [#allocation3], %s292
      %s294 = sshll.u32 [#allocation2], 4
      %s295 = int_to_ptr.vmem [resolvable:$true] %s294
      %300 = dma.vmem_to_hbm [thread:$0]  %s295, 256, %s5, [#allocation3], 128, 128, 8
    $region25: #{tpu_custom_call.1} parent=1 // pred_fallthru
      _
    // Predicated region
    $region26: #{tpu_custom_call.1} parent=1 // pred_check
      _
    $region27: #{tpu_custom_call.1} parent=1 // pred_check_branch
      %302 = sbr.rel (0) target = $region29
    $region28: #{tpu_custom_call.1} parent=1 // pred_region
      %s304 = ssub.s32 128, 128
      %305 = vsyncadd [#allocation5], %s304
      %s307 = sshll.u32 [#allocation4], 4
      %s308 = int_to_ptr.vmem [resolvable:$true] %s307
      %310 = dma.vmem_to_hbm [thread:$0]  %s308, 128, %s6, [#allocation5]
    $region29: #{tpu_custom_call.1} parent=1 // pred_fallthru
      _
    // Predicated region
    $region30: #{tpu_custom_call.1} parent=1 // pred_check
      _
    $region31: #{tpu_custom_call.1} parent=1 // pred_check_branch
      %312 = sbr.rel (0) target = $region33
    $region32: #{tpu_custom_call.1} parent=1 // pred_region
      %313 = dma.done [#allocation3], 256
    $region33: #{tpu_custom_call.1} parent=1 // pred_fallthru
      _
    // Predicated region
    $region34: #{tpu_custom_call.1} parent=1 // pred_check
      _
    $region35: #{tpu_custom_call.1} parent=1 // pred_check_branch
      %315 = sbr.rel (0) target = $region37
    $region36: #{tpu_custom_call.1} parent=1 // pred_region
      %316 = dma.done [#allocation5], 128
    $region37: #{tpu_custom_call.1} parent=1 // pred_fallthru
      _
    %317 = vsyncpa [#allocation3], 1
    %318 = vsyncpa [#allocation5], 1

// kernel: tpu_custom_call.1
$region0: #{tpu_custom_call.1}
  #allocation0 [shape = 'u32[]', space=smem, size = 0x4, offset = 0x4, fixed_abs, tag = 'smem constant byte address 0x4 - core index']
  #allocation1 [shape = 'u32[144,128]{1,0:T(1,128)}', space=vmem, size = 0x12000, scoped, tag = 'internal scratch']
  %s0 = inlined_call_operand.vmem [shape: f32[16,32], index: 0, kind: input, shape index: {}]
  %s1 = inlined_call_operand.vmem [shape: f32[1,32], index: 1, kind: input, shape index: {}]
  %s2 = inlined_call_operand.vmem [shape: bf16[32,128], index: 2, kind: input, shape index: {}]
  %s3 = inlined_call_operand.vmem [shape: f32[1,128], index: 3, kind: input, shape index: {}]
  %s4 = inlined_call_operand.vmem [shape: bf16[128,32], index: 4, kind: input, shape index: {}]
  %s5 = inlined_call_operand.hbm [shape: f32[16,32], index: 5, kind: output, shape index: {0}]
  %s6 = inlined_call_operand.hbm [shape: f32[8,32], index: 6, kind: output, shape index: {1}]
  %7 = xla_tuple %s5, %s6
  %s8 = sld [smem:[#allocation0]]
  $region38: #{tpu_custom_call.1} parent=0
    _
  %s10 = ssub.s32 1, %s8
  %s11 = scalar_select 0, %s10, %s8
  $region1: #{tpu_custom_call.1} parent=0
    #allocation2 [shape = 'u8[8192]{0}', space=vmem, size = 0x2000, scoped, tag = 'output window, operand 0, single buffered']
    #allocation3 [shape = 's32[1]{0}', space=sflag, size = 0x4, scoped, tag = 'scoped memory for tpu_custom_call.1']
    #allocation4 [shape = 'u8[4096]{0}', space=vmem, size = 0x1000, scoped, tag = 'output window, operand 1, single buffered']
    #allocation5 [shape = 's32[1]{0}', space=sflag, size = 0x4, scoped, tag = 'scoped memory for tpu_custom_call.1']
    %12 = vsyncpa [#allocation3], 0
    %13 = vsyncpa [#allocation5], 0
    // Predicated region
    $region2: #{tpu_custom_call.1} parent=1 // pred_check
      _
    $region3: #{tpu_custom_call.1} parent=1 // pred_check_branch
      %15 = sbr.rel (0) target = $region5
    $region4: #{tpu_custom_call.1} parent=1 // pred_region
      _
    $region5: #{tpu_custom_call.1} parent=1 // pred_fallthru
      _
    // Predicated region
    $region6: #{tpu_custom_call.1} parent=1 // pred_check
      _
    $region7: #{tpu_custom_call.1} parent=1 // pred_check_branch
      %17 = sbr.rel (0) target = $region9
    $region8: #{tpu_custom_call.1} parent=1 // pred_region
      _
    $region9: #{tpu_custom_call.1} parent=1 // pred_fallthru
      _
    // Predicated region
    $region10: #{tpu_custom_call.1} parent=1 // pred_check
      _
    $region11: #{tpu_custom_call.1} parent=1 // pred_check_branch
      %19 = sbr.rel (0) target = $region13
    $region12: #{tpu_custom_call.1} parent=1 // pred_region
      _
    $region13: #{tpu_custom_call.1} parent=1 // pred_fallthru
      _
    // Predicated region
    $region14: #{tpu_custom_call.1} parent=1 // pred_check
      _
    $region15: #{tpu_custom_call.1} parent=1 // pred_check_branch
      %21 = sbr.rel (0) target = $region17
    $region16: #{tpu_custom_call.1} parent=1 // pred_region
      _
    $region17: #{tpu_custom_call.1} parent=1 // pred_fallthru
      _
    // Predicated region
    $region18: #{tpu_custom_call.1} parent=1 // pred_check
      _
    $region19: #{tpu_custom_call.1} parent=1 // pred_check_branch
      %23 = sbr.rel (0) target = $region21
    $region20: #{tpu_custom_call.1} parent=1 // pred_region
      _
    $region21: #{tpu_custom_call.1} parent=1 // pred_fallthru
      _
    %v25 = vld [vmem:[%s0] sm:$0xff]
    %v26 = vld [vmem:[%s0 + $0x8] sm:$0xff]
    %v27 = vld [vmem:[%s1] sm:$0x1]
    %v28 = vld [vmem:[%s3] sm:$0x1]
    %v30 = vlaneseq
    %v31 = vshrl.u32 %v30, 7
    %v32 = vsub.s32 0, %v31
    %v33 = vrot.slane %v27, %v32
    %v35 = vsub.f32 %v25, %v33
    %v36 = vsub.f32 %v26, %v33
    %v37 = vpack.c.bf16 %v36, %v35
    %v38 = vld [vmem:[%s2] sm:$0xf]
    %v39 = vld [vmem:[%s2 + $0x4] sm:$0xf]
    %v40 = vld [vmem:[%s2 + $0x8] sm:$0xf]
    %v41 = vld [vmem:[%s2 + $0xc] sm:$0xf]
    %v43 = vlaneseq
    %v44 = vshrl.u32 %v43, 7
    %v45 = vsub.s32 0, %v44
    %v46 = vrot.slane %v28, %v45
    %v52 = vunpack.c.l.b16 %v38
    %v53 = vunpack.c.l.b16 %v39
    %v54 = vunpack.c.l.b16 %v40
    %v55 = vunpack.c.l.b16 %v41
    %v56 = vpack.c.b16 %v53, %v52
    %v57 = vpack.c.b16 %v55, %v54
    %vm60 = vcmask 261120
    %v62 = vsel %vm60, %v37, 0
    %64 = vmatprep.subr.bf16.mxu0 0
    %65 = vmatpush1.bf16.msra.mxu0 %v56
    %66 = vmatprep.subr.bf16.mxu0 0
    %67 = vmatpush1.bf16.msra.mxu0 %v57
    %68 = vmatprep.subr.bf16.mxu0 0
    %69 = vmatpush1.bf16.msra.mxu0 0
    %70 = vmatprep.subr.bf16.mxu0 0
    %71 = vmatpush1.bf16.msra.mxu0 0
    %72 = vmatprep.subr.bf16.mxu0 0
    %73 = vmatpush1.bf16.msra.mxu0 0
    %74 = vmatprep.subr.bf16.mxu0 0
    %75 = vmatpush1.bf16.msra.mxu0 0
    %76 = vmatprep.subr.bf16.mxu0 0
    %77 = vmatpush1.bf16.msra.mxu0 0
    %78 = vmatprep.subr.bf16.mxu0 0
    %79 = vmatpush1.bf16.msra.mxu0 0
    %80 = vmatprep.subr.bf16.mxu0 0
    %81 = vmatpush1.bf16.msra.mxu0 0
    %82 = vmatprep.subr.bf16.mxu0 0
    %83 = vmatpush1.bf16.msra.mxu0 0
    %84 = vmatprep.subr.bf16.mxu0 0
    %85 = vmatpush1.bf16.msra.mxu0 0
    %86 = vmatprep.subr.bf16.mxu0 0
    %87 = vmatpush1.bf16.msra.mxu0 0
    %88 = vmatprep.subr.bf16.mxu0 0
    %89 = vmatpush1.bf16.msra.mxu0 0
    %90 = vmatprep.subr.bf16.mxu0 0
    %91 = vmatpush1.bf16.msra.mxu0 0
    %92 = vmatprep.subr.bf16.mxu0 0
    %93 = vmatpush1.bf16.msra.mxu0 0
    %94 = vmatprep.subr.bf16.mxu0 0
    %95 = vmatpush1.bf16.msra.mxu0 0
    %96 = vmatprep.mubr.bf16.mxu0 0
    %97 = vmatmul.mubr.bf16.gmra.mrb[0].mxu0 %v62
    %v98 = vpop.f32.mrb[0].mxu0
    %v99 = vadd.f32 %v46, %v98
    %v100 = vpop.f32.mrb[0].mxu0
    %v101 = vpop.f32.mrb[0].mxu0
    %v102 = vadd.f32 %v46, %v101
    %v103 = vpop.f32.mrb[0].mxu0
    %104 = vdwg.mxu0
    %v105 = vmax.f32 %v99, 0.0
    %v106 = vmax.f32 %v102, 0.0
    %107 = vmax.xlane.f32.xlu0 %v105
    %v108 = vpop.xlane.xlu0 %107
    %109 = vmax.xlane.f32.xlu0 %v106
    %v110 = vpop.xlane.xlu0 %109
    %vm111 = vcmp.ge.f32.partialorder %v105, %v108
    %vm112 = vcmp.ge.f32.partialorder %v106, %v110
    %v113 = vsel %vm111, -inf, %v105
    %v114 = vsel %vm112, -inf, %v106
    %115 = vmax.xlane.f32.xlu0 %v113
    %v116 = vpop.xlane.xlu0 %115
    %117 = vmax.xlane.f32.xlu0 %v114
    %v118 = vpop.xlane.xlu0 %117
    %vm119 = vcmp.ge.f32.partialorder %v113, %v116
    %vm120 = vcmp.ge.f32.partialorder %v114, %v118
    %v121 = vsel %vm119, -inf, %v113
    %v122 = vsel %vm120, -inf, %v114
    %123 = vmax.xlane.f32.xlu0 %v121
    %v124 = vpop.xlane.xlu0 %123
    %125 = vmax.xlane.f32.xlu0 %v122
    %v126 = vpop.xlane.xlu0 %125
    %vm127 = vcmp.ge.f32.partialorder %v121, %v124
    %vm128 = vcmp.ge.f32.partialorder %v122, %v126
    %v129 = vsel %vm127, -inf, %v121
    %v130 = vsel %vm128, -inf, %v122
    %131 = vmax.xlane.f32.xlu0 %v129
    %v132 = vpop.xlane.xlu0 %131
    %133 = vmax.xlane.f32.xlu0 %v130
    %v134 = vpop.xlane.xlu0 %133
    %vm135 = vcmp.ge.f32.partialorder %v105, %v132
    %vm136 = vcmp.ge.f32.partialorder %v106, %v134
    %v137 = vsel %vm135, %v105, 0.0
    %v138 = vsel %vm136, %v106, 0.0
    %v139 = vpack.c.bf16 %v138, %v137
    %v140 = vld [vmem:[%s4] sm:$0xf]
    %v141 = vld [vmem:[%s4 + $0x4] sm:$0xf]
    %v142 = vld [vmem:[%s4 + $0x8] sm:$0xf]
    %v143 = vld [vmem:[%s4 + $0xc] sm:$0xf]
    %v144 = vld [vmem:[%s4 + $0x10] sm:$0xf]
    %v145 = vld [vmem:[%s4 + $0x14] sm:$0xf]
    %v146 = vld [vmem:[%s4 + $0x18] sm:$0xf]
    %v147 = vld [vmem:[%s4 + $0x1c] sm:$0xf]
    %v148 = vld [vmem:[%s4 + $0x20] sm:$0xf]
    %v149 = vld [vmem:[%s4 + $0x24] sm:$0xf]
    %v150 = vld [vmem:[%s4 + $0x28] sm:$0xf]
    %v151 = vld [vmem:[%s4 + $0x2c] sm:$0xf]
    %v152 = vld [vmem:[%s4 + $0x30] sm:$0xf]
    %v153 = vld [vmem:[%s4 + $0x34] sm:$0xf]
    %v154 = vld [vmem:[%s4 + $0x38] sm:$0xf]
    %v155 = vld [vmem:[%s4 + $0x3c] sm:$0xf]
    %v172 = vunpack.c.l.b16 %v140
    %v173 = vunpack.c.l.b16 %v141
    %v174 = vunpack.c.l.b16 %v142
    %v175 = vunpack.c.l.b16 %v143
    %v176 = vunpack.c.l.b16 %v144
    %v177 = vunpack.c.l.b16 %v145
    %v178 = vunpack.c.l.b16 %v146
    %v179 = vunpack.c.l.b16 %v147
    %v180 = vunpack.c.l.b16 %v148
    %v181 = vunpack.c.l.b16 %v149
    %v182 = vunpack.c.l.b16 %v150
    %v183 = vunpack.c.l.b16 %v151
    %v184 = vunpack.c.l.b16 %v152
    %v185 = vunpack.c.l.b16 %v153
    %v186 = vunpack.c.l.b16 %v154
    %v187 = vunpack.c.l.b16 %v155
    %v188 = vpack.c.b16 %v173, %v172
    %v189 = vpack.c.b16 %v175, %v174
    %v190 = vpack.c.b16 %v177, %v176
    %v191 = vpack.c.b16 %v179, %v178
    %v192 = vpack.c.b16 %v181, %v180
    %v193 = vpack.c.b16 %v183, %v182
    %v194 = vpack.c.b16 %v185, %v184
    %v195 = vpack.c.b16 %v187, %v186
    %204 = vmatprep.subr.bf16.mxu0 0
    %205 = vmatpush1.bf16.msra.mxu0 %v188
    %206 = vmatprep.subr.bf16.mxu0 0
    %207 = vmatpush1.bf16.msra.mxu0 %v189
    %208 = vmatprep.subr.bf16.mxu0 0
    %209 = vmatpush1.bf16.msra.mxu0 %v190
    %210 = vmatprep.subr.bf16.mxu0 0
    %211 = vmatpush1.bf16.msra.mxu0 %v191
    %212 = vmatprep.subr.bf16.mxu0 0
    %213 = vmatpush1.bf16.msra.mxu0 %v192
    %214 = vmatprep.subr.bf16.mxu0 0
    %215 = vmatpush1.bf16.msra.mxu0 %v193
    %216 = vmatprep.subr.bf16.mxu0 0
    %217 = vmatpush1.bf16.msra.mxu0 %v194
    %218 = vmatprep.subr.bf16.mxu0 0
    %219 = vmatpush1.bf16.msra.mxu0 %v195
    %220 = vmatprep.subr.bf16.mxu0 0
    %221 = vmatpush1.bf16.msra.mxu0 0
    %222 = vmatprep.subr.bf16.mxu0 0
    %223 = vmatpush1.bf16.msra.mxu0 0
    %224 = vmatprep.subr.bf16.mxu0 0
    %225 = vmatpush1.bf16.msra.mxu0 0
    %226 = vmatprep.subr.bf16.mxu0 0
    %227 = vmatpush1.bf16.msra.mxu0 0
    %228 = vmatprep.subr.bf16.mxu0 0
    %229 = vmatpush1.bf16.msra.mxu0 0
    %230 = vmatprep.subr.bf16.mxu0 0
    %231 = vmatpush1.bf16.msra.mxu0 0
    %232 = vmatprep.subr.bf16.mxu0 0
    %233 = vmatpush1.bf16.msra.mxu0 0
    %234 = vmatprep.subr.bf16.mxu0 0
    %235 = vmatpush1.bf16.msra.mxu0 0
    %236 = vmatprep.mubr.bf16.mxu0 0
    %237 = vmatmul.mubr.bf16.gmra.mrb[0].mxu0 %v139
    %v238 = vpop.f32.mrb[0].mxu0
    %v239 = vadd.f32 %v33, %v238
    %v240 = vpop.f32.mrb[0].mxu0
    %v241 = vpop.f32.mrb[0].mxu0
    %v242 = vadd.f32 %v33, %v241
    %v243 = vpop.f32.mrb[0].mxu0
    %244 = vdwg.mxu0
    %245 = vst.msk [vmem:[#allocation2] sm:$0xff] %vm60, %v239
    %246 = vst.msk [vmem:[#allocation2 + $0x8] sm:$0xff] %vm60, %v242
    %v247 = vsub.f32 %v239, %v25
    %v248 = vsub.f32 %v242, %v26
    %v249 = vsel %vm60, %v25, 0.0
    %v250 = vsel %vm60, %v26, 0.0
    %v251 = vadd.f32 %v249, %v250
    %v252 = vrot.slane %v251, 4
    %v253 = vadd.f32 %v251, %v252
    %v254 = vrot.slane %v253, 2
    %v255 = vadd.f32 %v253, %v254
    %v256 = vrot.slane %v255, 1
    %v257 = vadd.f32 %v255, %v256
    %v258 = vmul.f32 %v25, %v25
    %v259 = vmul.f32 %v26, %v26
    %v260 = vsel %vm60, %v258, 0.0
    %v261 = vsel %vm60, %v259, 0.0
    %v262 = vadd.f32 %v260, %v261
    %v263 = vrot.slane %v262, 4
    %v264 = vadd.f32 %v262, %v263
    %v265 = vrot.slane %v264, 2
    %v266 = vadd.f32 %v264, %v265
    %v267 = vrot.slane %v266, 1
    %v268 = vadd.f32 %v266, %v267
    %v269 = vmul.f32 %v247, %v247
    %v270 = vmul.f32 %v248, %v248
    %v271 = vsel %vm60, %v269, 0.0
    %v272 = vsel %vm60, %v270, 0.0
    %v273 = vadd.f32 %v271, %v272
    %v274 = vrot.slane %v273, 4
    %v275 = vadd.f32 %v273, %v274
    %v276 = vrot.slane %v275, 2
    %v277 = vadd.f32 %v275, %v276
    %v278 = vrot.slane %v277, 1
    %v279 = vadd.f32 %v277, %v278
    %v280 = vlaneseq
    %v281 = vshrl.u32 %v280, 7
    %vm282 = vcmp.eq.s32.totalorder %v281, 0
    %vm283 = vcmp.eq.s32.totalorder %v281, 1
    %vm284 = vcmp.eq.s32.totalorder %v281, 2
    %v285 = vsel %vm284, %v279, 0.0
    %v286 = vsel %vm283, %v268, %v285
    %v287 = vsel %vm282, %v257, %v286
    %288 = vst.msk [vmem:[#allocation4] sm:$0xff] %vm60, %v287
    // Predicated region
    $region22: #{tpu_custom_call.1} parent=1 // pred_check
      _
    $region23: #{tpu_custom_call.1} parent=1 // pred_check_branch
      %290 = sbr.rel (0) target = $region25
    $region24: #{tpu_custom_call.1} parent=1 // pred_region
      %s292 = ssub.s32 256, 256
      %293 = vsyncadd [#allocation3], %s292
      %s294 = sshll.u32 [#allocation2], 4
      %s295 = int_to_ptr.vmem [resolvable:$true] %s294
      %300 = dma.vmem_to_hbm [thread:$0]  %s295, 256, %s5, [#allocation3], 128, 128, 8
    $region25: #{tpu_custom_call.1} parent=1 // pred_fallthru
      _
    // Predicated region
    $region26: #{tpu_custom_call.1} parent=1 // pred_check
      _
    $region27: #{tpu_custom_call.1} parent=1 // pred_check_branch
      %302 = sbr.rel (0) target = $region29
    $region28: #{tpu_custom_call.1} parent=1 // pred_region
      %s304 = ssub.s32 128, 128
      %305 = vsyncadd [#allocation5], %s304
      %s307 = sshll.u32 [#allocation4], 4
      %s308 = int_to_ptr.vmem [resolvable:$true] %s307
      %310 = dma.vmem_to_hbm [thread:$0]  %s308, 128, %s6, [#allocation5]
    $region29: #{tpu_custom_call.1} parent=1 // pred_fallthru
      _
    // Predicated region
    $region30: #{tpu_custom_call.1} parent=1 // pred_check
      _
    $region31: #{tpu_custom_call.1} parent=1 // pred_check_branch
      %312 = sbr.rel (0) target = $region33
    $region32: #{tpu_custom_call.1} parent=1 // pred_region
      %313 = dma.done [#allocation3], 256
    $region33: #{tpu_custom_call.1} parent=1 // pred_fallthru
      _
    // Predicated region
    $region34: #{tpu_custom_call.1} parent=1 // pred_check
      _
    $region35: #{tpu_custom_call.1} parent=1 // pred_check_branch
      %315 = sbr.rel (0) target = $region37
    $region36: #{tpu_custom_call.1} parent=1 // pred_region
      %316 = dma.done [#allocation5], 128
    $region37: #{tpu_custom_call.1} parent=1 // pred_fallthru
      _
    %317 = vsyncpa [#allocation3], 1
    %318 = vsyncpa [#allocation5], 1

</llo_original>
